<compile_context>
chip_gen: v5e
topology: v5e:2x2
jax: 0.10.0
libtpu: 0.0.40
codegen_flags: <defaults>
</compile_context>

<pallas_src>
import functools

import jax
import jax.numpy as jnp
import numpy as np
from jax import lax
from jax.experimental import pallas as pl
from jax.experimental.pallas import tpu as pltpu


def _round_up(x, m):
    return ((x + m - 1) // m) * m


def _lstm_last_kernel(lens_ref, gx_ref, whh_ref, out_ref, h_sc, c_sc, *,
                      time_block):
    """One grid step = `time_block` LSTM timesteps for one batch tile.

    lens_ref: (TB, 1)        int32 sequence lengths
    gx_ref  : (TT, TB, 4Hp)  precomputed x @ W_ih^T + bias (time-major)
    whh_ref : (Hp, 4Hp)      recurrent weights (gate-padded, lane aligned)
    out_ref : (TB, Hp)       resident accumulator: h at t == length-1
    h_sc/c_sc: (TB, Hp)      recurrent state, persists across time blocks
    """
    tb = pl.program_id(1)
    Hp = h_sc.shape[-1]

    @pl.when(tb == 0)
    def _():
        h_sc[...] = jnp.zeros_like(h_sc)
        c_sc[...] = jnp.zeros_like(c_sc)
        out_ref[...] = jnp.zeros_like(out_ref)

    # Hoisted out of the unrolled loop: constant weight vregs and lengths-1.
    whh = whh_ref[...]                        # (Hp, 4Hp), resident across loop
    last_t = lens_ref[...] - 1                # (TB, 1)
    t_base = tb * time_block

    def step(i, carry):
        h, c, out = carry
        # Only the H-contraction stays on the serial path; the D-contraction
        # and bias were hoisted into the big pre-kernel GEMM.
        gates = gx_ref[i] + jnp.dot(h, whh,
                                    preferred_element_type=jnp.float32)
        i_g = jax.nn.sigmoid(gates[:, 0 * Hp:1 * Hp])
        f_g = jax.nn.sigmoid(gates[:, 1 * Hp:2 * Hp])
        g_g = jnp.tanh(gates[:, 2 * Hp:3 * Hp])
        o_g = jax.nn.sigmoid(gates[:, 3 * Hp:4 * Hp])
        c = f_g * c + i_g * g_g
        h = o_g * jnp.tanh(c)
        # Select-last-unpadded: keep h_t only where t == length-1.
        is_last = last_t == (t_base + i)      # (TB, 1) bool, broadcasts over Hp
        out = jnp.where(is_last, h, out)
        return (h, c, out)

    h, c, out = lax.fori_loop(0, time_block, step,
                              (h_sc[...], c_sc[...], out_ref[...]),
                              unroll=True)

    h_sc[...] = h
    c_sc[...] = c
    out_ref[...] = out


def attentive_rnn_forward(x, lengths, w_ih, w_hh, b_ih, b_hh, *, time_block=16):
    """AttentiveRNN.forward (attention=False, unidirectional, 1 layer, eval).

    x: (B, T, D) f32, lengths: (B,) int.  Returns last_hidden (B, H) f32.
    Weights use torch.nn.LSTM layout: w_ih (4H, D), w_hh (4H, H), gate order
    [i, f, g, o].
    """
    B, T, D = x.shape
    H = w_hh.shape[0] // 4

    # Padded sizes: lane-aligned hidden (gate slices & output stores full-lane),
    # sublane-aligned batch, time padded to a multiple of the time block.
    Hp = _round_up(max(H, 128), 128)
    Bp = _round_up(max(B, 8), 8)
    TB = Bp if Bp <= 128 else 128
    Bp = _round_up(Bp, TB)
    TT = max(1, min(time_block, T))
    Tp = _round_up(T, TT)

    f32 = jnp.float32
    wih_t = jnp.transpose(w_ih.astype(f32), (1, 0))   # (D, 4H)
    whh_t = jnp.transpose(w_hh.astype(f32), (1, 0))   # (H, 4H)
    bias = (b_ih + b_hh).astype(f32)                  # (4H,)

    # Gate-pad weights/bias so every gate occupies a 128-multiple lane slab.
    # Zero padding keeps the extra hidden units inert (their c/h stay 0 and the
    # zeroed W_hh rows mean they never influence the real gates).
    wih_p = jnp.zeros((D, 4 * Hp), f32)
    whh_p = jnp.zeros((Hp, 4 * Hp), f32)
    bias_p = jnp.zeros((1, 4 * Hp), f32)
    for k in range(4):
        wih_p = wih_p.at[:, k * Hp:k * Hp + H].set(wih_t[:, k * H:(k + 1) * H])
        whh_p = whh_p.at[:H, k * Hp:k * Hp + H].set(whh_t[:, k * H:(k + 1) * H])
        bias_p = bias_p.at[:, k * Hp:k * Hp + H].set(bias[k * H:(k + 1) * H])

    # Pad batch/time with zeros; padded rows get length 1 and are sliced away.
    x_p = jnp.zeros((Bp, Tp, D), f32).at[:B, :T, :].set(x.astype(f32))
    lens_p = jnp.ones((Bp, 1), jnp.int32).at[:B, 0].set(lengths.astype(jnp.int32))

    # Hoisted input projection: one large MXU-friendly GEMM, emitted time-major
    # so the recurrent kernel streams lane-dense (TT, TB, 4Hp) tiles directly
    # (no separate HBM transpose pass of x).
    gates_x = jnp.einsum('btd,dg->tbg', x_p, wih_p,
                         preferred_element_type=f32) + bias_p   # (Tp, Bp, 4Hp)

    grid = (Bp // TB, Tp // TT)

    grid_spec = pltpu.PrefetchScalarGridSpec(
        num_scalar_prefetch=0,
        grid=grid,
        in_specs=[
            pl.BlockSpec((TB, 1), lambda b, t: (b, 0)),              # lengths
            pl.BlockSpec((TT, TB, 4 * Hp), lambda b, t: (t, b, 0)),  # gates_x
            pl.BlockSpec((Hp, 4 * Hp), lambda b, t: (0, 0)),         # W_hh^T
        ],
        out_specs=pl.BlockSpec((TB, Hp), lambda b, t: (b, 0)),       # resident
        scratch_shapes=[
            pltpu.VMEM((TB, Hp), jnp.float32),                       # h state
            pltpu.VMEM((TB, Hp), jnp.float32),                       # c state
        ],
    )

    out = pl.pallas_call(
        functools.partial(_lstm_last_kernel, time_block=TT),
        out_shape=jax.ShapeDtypeStruct((Bp, Hp), jnp.float32),
        grid_spec=grid_spec,
        compiler_params=pltpu.CompilerParams(
            # Batch tiles are independent (v7x megacore can split them across
            # the two TensorCores); time is the serial recurrence axis.
            dimension_semantics=("parallel", "arbitrary"),
        ),
    )(lens_p, gates_x, whh_p)

    return out[:B, :H]


def _reference(x, lengths, w_ih, w_hh, b_ih, b_hh):
    """Pure-JAX reference mirroring torch.nn.LSTM + select-last-unpadded."""
    B, T, D = x.shape
    H = w_hh.shape[0] // 4
    wih_t = w_ih.T
    whh_t = w_hh.T
    bias = b_ih + b_hh

    def step(carry, x_t):
        h, c = carry
        gates = x_t @ wih_t + h @ whh_t + bias
        i = jax.nn.sigmoid(gates[:, :H])
        f = jax.nn.sigmoid(gates[:, H:2 * H])
        g = jnp.tanh(gates[:, 2 * H:3 * H])
        o = jax.nn.sigmoid(gates[:, 3 * H:])
        c = f * c + i * g
        h = o * jnp.tanh(c)
        return (h, c), h

    init = (jnp.zeros((B, H), jnp.float32), jnp.zeros((B, H), jnp.float32))
    _, hs = lax.scan(step, init, jnp.transpose(x, (1, 0, 2)))
    hs = jnp.transpose(hs, (1, 0, 2))                      # (B, T, H)
    return hs[jnp.arange(B), lengths - 1]


if __name__ == "__main__":
    B, T, D, H = 2, 8, 16, 32

    key = jax.random.PRNGKey(0)
    k_x, k_wih, k_whh, k_bih, k_bhh = jax.random.split(key, 5)

    # torch.nn.LSTM default init: U(-1/sqrt(H), 1/sqrt(H))
    bound = 1.0 / np.sqrt(H)
    w_ih = jax.random.uniform(k_wih, (4 * H, D), jnp.float32, -bound, bound)
    w_hh = jax.random.uniform(k_whh, (4 * H, H), jnp.float32, -bound, bound)
    b_ih = jax.random.uniform(k_bih, (4 * H,), jnp.float32, -bound, bound)
    b_hh = jax.random.uniform(k_bhh, (4 * H,), jnp.float32, -bound, bound)

    x = jax.random.normal(k_x, (B, T, D), jnp.float32)
    lengths = jnp.array([T, 5], dtype=jnp.int32)

    # time_block=4 -> two time blocks, exercising state carry across grid steps.
    out = attentive_rnn_forward(x, lengths, w_ih, w_hh, b_ih, b_hh,
                                time_block=4)
    out = jax.block_until_ready(out)

    ref = _reference(x, lengths, w_ih, w_hh, b_ih, b_hh)
    np.testing.assert_allclose(np.asarray(out), np.asarray(ref),
                               rtol=1e-4, atol=1e-4)

    print("KERNEL_OK")
</pallas_src>

<mosaic_0001>
module attributes {stable_mosaic.version = 11 : i64} {
  func.func @_lstm_last_kernel(%arg0: i32, %arg1: i32, %arg2: memref<8x1xi32, #tpu.memory_space<vmem>>, %arg3: memref<4x8x512xf32, #tpu.memory_space<vmem>>, %arg4: memref<128x512xf32, #tpu.memory_space<vmem>>, %arg5: memref<8x128xf32, #tpu.memory_space<vmem>>, %arg6: memref<8x128xf32, #tpu.memory_space<vmem>>, %arg7: memref<8x128xf32, #tpu.memory_space<vmem>>) attributes {dimension_semantics = [#tpu.dimension_semantics<parallel>, #tpu.dimension_semantics<arbitrary>], iteration_bounds = array<i64: 1, 2>, scalar_prefetch = 0 : i64, scratch_operands = 2 : i64, tpu.core_type = #tpu.core_type<tc>, window_params = [{transform_indices = @transform_0, window_bounds = array<i64: 8, 1>}, {transform_indices = @transform_1, window_bounds = array<i64: 4, 8, 512>}, {pipeline_mode = #tpu.pipeline_mode<synchronous>, transform_indices = @transform_2, window_bounds = array<i64: 128, 512>}, {transform_indices = @transform_3, window_bounds = array<i64: 8, 128>}]} {
    %c0_i32 = arith.constant 0 : i32
    %0 = arith.cmpi eq, %arg1, %c0_i32 : i32
    %1 = arith.extui %0 : i1 to i32
    %c0_i32_0 = arith.constant 0 : i32
    %2 = arith.cmpi ne, %1, %c0_i32_0 : i32
    scf.if %2 {
      %cst_42 = arith.constant 0.000000e+00 : f32
      %158 = vector.broadcast %cst_42 : f32 to vector<8x128xf32>
      %c0_43 = arith.constant 0 : index
      %c0_44 = arith.constant 0 : index
      %159 = vector.load %arg6[%c0_43, %c0_44] : memref<8x128xf32, #tpu.memory_space<vmem>>, vector<8x128xf32>
      tpu.vector_store %arg6[%c0_43, %c0_44], %158 {strides = array<i32>} : memref<8x128xf32, #tpu.memory_space<vmem>>, vector<8x128xf32>,
      %cst_45 = arith.constant 0.000000e+00 : f32
      %160 = vector.broadcast %cst_45 : f32 to vector<8x128xf32>
      %c0_46 = arith.constant 0 : index
      %c0_47 = arith.constant 0 : index
      %161 = vector.load %arg7[%c0_46, %c0_47] : memref<8x128xf32, #tpu.memory_space<vmem>>, vector<8x128xf32>
      tpu.vector_store %arg7[%c0_46, %c0_47], %160 {strides = array<i32>} : memref<8x128xf32, #tpu.memory_space<vmem>>, vector<8x128xf32>,
      %cst_48 = arith.constant 0.000000e+00 : f32
      %162 = vector.broadcast %cst_48 : f32 to vector<8x128xf32>
      %c0_49 = arith.constant 0 : index
      %c0_50 = arith.constant 0 : index
      %163 = vector.load %arg5[%c0_49, %c0_50] : memref<8x128xf32, #tpu.memory_space<vmem>>, vector<8x128xf32>
      tpu.vector_store %arg5[%c0_49, %c0_50], %162 {strides = array<i32>} : memref<8x128xf32, #tpu.memory_space<vmem>>, vector<8x128xf32>,
    } else {
    }
    %c0 = arith.constant 0 : index
    %c0_1 = arith.constant 0 : index
    %3 = vector.load %arg4[%c0, %c0_1] : memref<128x512xf32, #tpu.memory_space<vmem>>, vector<128x512xf32>
    %c0_2 = arith.constant 0 : index
    %c0_3 = arith.constant 0 : index
    %4 = vector.load %arg2[%c0_2, %c0_3] : memref<8x1xi32, #tpu.memory_space<vmem>>, vector<8x1xi32>
    %c1_i32 = arith.constant 1 : i32
    %5 = vector.broadcast %c1_i32 : i32 to vector<8x1xi32>
    %6 = arith.subi %4, %5 : vector<8x1xi32>
    %c4_i32 = arith.constant 4 : i32
    %7 = arith.muli %arg1, %c4_i32 : i32
    %c0_4 = arith.constant 0 : index
    %c0_5 = arith.constant 0 : index
    %8 = vector.load %arg6[%c0_4, %c0_5] : memref<8x128xf32, #tpu.memory_space<vmem>>, vector<8x128xf32>
    %c0_6 = arith.constant 0 : index
    %c0_7 = arith.constant 0 : index
    %9 = vector.load %arg7[%c0_6, %c0_7] : memref<8x128xf32, #tpu.memory_space<vmem>>, vector<8x128xf32>
    %c0_8 = arith.constant 0 : index
    %c0_9 = arith.constant 0 : index
    %10 = vector.load %arg5[%c0_8, %c0_9] : memref<8x128xf32, #tpu.memory_space<vmem>>, vector<8x128xf32>
    %c0_i32_10 = arith.constant 0 : i32
    %11 = arith.index_cast %c0_i32_10 : i32 to index
    %c0_11 = arith.constant 0 : index
    %c0_12 = arith.constant 0 : index
    %12 = vector.load %arg3[%11, %c0_11, %c0_12] : memref<4x8x512xf32, #tpu.memory_space<vmem>>, vector<1x8x512xf32>
    %13 = vector.shape_cast %12 : vector<1x8x512xf32> to vector<8x512xf32>
    %cst = arith.constant dense<0.000000e+00> : vector<8x512xf32>
    %14 = tpu.matmul %8, %3, %cst {dimension_numbers = #tpu.dot_dimension_numbers<[1], [0], [0], [1], [0, 0, 1, 1], [], []>} : vector<8x128xf32>, vector<128x512xf32>, vector<8x512xf32> -> vector<8x512xf32>
    %15 = arith.addf %13, %14 : vector<8x512xf32>
    %16 = vector.extract_strided_slice %15 {offsets = [0, 0], sizes = [8, 128], strides = [1, 1]} : vector<8x512xf32> to vector<8x128xf32>
    %17 = arith.negf %16 : vector<8x128xf32>
    %18 = math.exp %17 : vector<8x128xf32>
    %cst_13 = arith.constant 1.000000e+00 : f32
    %19 = vector.broadcast %cst_13 : f32 to vector<8x128xf32>
    %20 = arith.addf %19, %18 : vector<8x128xf32>
    %21 = arith.divf %19, %20 : vector<8x128xf32>
    %22 = vector.extract_strided_slice %15 {offsets = [0, 128], sizes = [8, 128], strides = [1, 1]} : vector<8x512xf32> to vector<8x128xf32>
    %23 = arith.negf %22 : vector<8x128xf32>
    %24 = math.exp %23 : vector<8x128xf32>
    %cst_14 = arith.constant 1.000000e+00 : f32
    %25 = vector.broadcast %cst_14 : f32 to vector<8x128xf32>
    %26 = arith.addf %25, %24 : vector<8x128xf32>
    %27 = arith.divf %25, %26 : vector<8x128xf32>
    %28 = vector.extract_strided_slice %15 {offsets = [0, 256], sizes = [8, 128], strides = [1, 1]} : vector<8x512xf32> to vector<8x128xf32>
    %29 = math.tanh %28 : vector<8x128xf32>
    %30 = vector.extract_strided_slice %15 {offsets = [0, 384], sizes = [8, 128], strides = [1, 1]} : vector<8x512xf32> to vector<8x128xf32>
    %31 = arith.negf %30 : vector<8x128xf32>
    %32 = math.exp %31 : vector<8x128xf32>
    %cst_15 = arith.constant 1.000000e+00 : f32
    %33 = vector.broadcast %cst_15 : f32 to vector<8x128xf32>
    %34 = arith.addf %33, %32 : vector<8x128xf32>
    %35 = arith.divf %33, %34 : vector<8x128xf32>
    %36 = arith.mulf %27, %9 : vector<8x128xf32>
    %37 = arith.mulf %21, %29 : vector<8x128xf32>
    %38 = arith.addf %36, %37 : vector<8x128xf32>
    %39 = math.tanh %38 : vector<8x128xf32>
    %40 = arith.mulf %35, %39 : vector<8x128xf32>
    %41 = arith.addi %7, %c0_i32_10 : i32
    %42 = vector.broadcast %41 : i32 to vector<8x1xi32>
    %43 = arith.cmpi eq, %6, %42 : vector<8x1xi32>
    %44 = vector.shape_cast %43 : vector<8x1xi1> to vector<8x1xi1>
    %45 = vector.broadcast %44 : vector<8x1xi1> to vector<8x128xi1>
    %46 = arith.select %45, %40, %10 : vector<8x128xi1>, vector<8x128xf32>
    %c1_i32_16 = arith.constant 1 : i32
    %47 = arith.index_cast %c1_i32_16 : i32 to index
    %c0_17 = arith.constant 0 : index
    %c0_18 = arith.constant 0 : index
    %48 = vector.load %arg3[%47, %c0_17, %c0_18] : memref<4x8x512xf32, #tpu.memory_space<vmem>>, vector<1x8x512xf32>
    %49 = vector.shape_cast %48 : vector<1x8x512xf32> to vector<8x512xf32>
    %cst_19 = arith.constant dense<0.000000e+00> : vector<8x512xf32>
    %50 = tpu.matmul %40, %3, %cst_19 {dimension_numbers = #tpu.dot_dimension_numbers<[1], [0], [0], [1], [0, 0, 1, 1], [], []>} : vector<8x128xf32>, vector<128x512xf32>, vector<8x512xf32> -> vector<8x512xf32>
    %51 = arith.addf %49, %50 : vector<8x512xf32>
    %52 = vector.extract_strided_slice %51 {offsets = [0, 0], sizes = [8, 128], strides = [1, 1]} : vector<8x512xf32> to vector<8x128xf32>
    %53 = arith.negf %52 : vector<8x128xf32>
    %54 = math.exp %53 : vector<8x128xf32>
    %cst_20 = arith.constant 1.000000e+00 : f32
    %55 = vector.broadcast %cst_20 : f32 to vector<8x128xf32>
    %56 = arith.addf %55, %54 : vector<8x128xf32>
    %57 = arith.divf %55, %56 : vector<8x128xf32>
    %58 = vector.extract_strided_slice %51 {offsets = [0, 128], sizes = [8, 128], strides = [1, 1]} : vector<8x512xf32> to vector<8x128xf32>
    %59 = arith.negf %58 : vector<8x128xf32>
    %60 = math.exp %59 : vector<8x128xf32>
    %cst_21 = arith.constant 1.000000e+00 : f32
    %61 = vector.broadcast %cst_21 : f32 to vector<8x128xf32>
    %62 = arith.addf %61, %60 : vector<8x128xf32>
    %63 = arith.divf %61, %62 : vector<8x128xf32>
    %64 = vector.extract_strided_slice %51 {offsets = [0, 256], sizes = [8, 128], strides = [1, 1]} : vector<8x512xf32> to vector<8x128xf32>
    %65 = math.tanh %64 : vector<8x128xf32>
    %66 = vector.extract_strided_slice %51 {offsets = [0, 384], sizes = [8, 128], strides = [1, 1]} : vector<8x512xf32> to vector<8x128xf32>
    %67 = arith.negf %66 : vector<8x128xf32>
    %68 = math.exp %67 : vector<8x128xf32>
    %cst_22 = arith.constant 1.000000e+00 : f32
    %69 = vector.broadcast %cst_22 : f32 to vector<8x128xf32>
    %70 = arith.addf %69, %68 : vector<8x128xf32>
    %71 = arith.divf %69, %70 : vector<8x128xf32>
    %72 = arith.mulf %63, %38 : vector<8x128xf32>
    %73 = arith.mulf %57, %65 : vector<8x128xf32>
    %74 = arith.addf %72, %73 : vector<8x128xf32>
    %75 = math.tanh %74 : vector<8x128xf32>
    %76 = arith.mulf %71, %75 : vector<8x128xf32>
    %77 = arith.addi %7, %c1_i32_16 : i32
    %78 = vector.broadcast %77 : i32 to vector<8x1xi32>
    %79 = arith.cmpi eq, %6, %78 : vector<8x1xi32>
    %80 = vector.shape_cast %79 : vector<8x1xi1> to vector<8x1xi1>
    %81 = vector.broadcast %80 : vector<8x1xi1> to vector<8x128xi1>
    %82 = arith.select %81, %76, %46 : vector<8x128xi1>, vector<8x128xf32>
    %c2_i32 = arith.constant 2 : i32
    %83 = arith.index_cast %c2_i32 : i32 to index
    %c0_23 = arith.constant 0 : index
    %c0_24 = arith.constant 0 : index
    %84 = vector.load %arg3[%83, %c0_23, %c0_24] : memref<4x8x512xf32, #tpu.memory_space<vmem>>, vector<1x8x512xf32>
    %85 = vector.shape_cast %84 : vector<1x8x512xf32> to vector<8x512xf32>
    %cst_25 = arith.constant dense<0.000000e+00> : vector<8x512xf32>
    %86 = tpu.matmul %76, %3, %cst_25 {dimension_numbers = #tpu.dot_dimension_numbers<[1], [0], [0], [1], [0, 0, 1, 1], [], []>} : vector<8x128xf32>, vector<128x512xf32>, vector<8x512xf32> -> vector<8x512xf32>
    %87 = arith.addf %85, %86 : vector<8x512xf32>
    %88 = vector.extract_strided_slice %87 {offsets = [0, 0], sizes = [8, 128], strides = [1, 1]} : vector<8x512xf32> to vector<8x128xf32>
    %89 = arith.negf %88 : vector<8x128xf32>
    %90 = math.exp %89 : vector<8x128xf32>
    %cst_26 = arith.constant 1.000000e+00 : f32
    %91 = vector.broadcast %cst_26 : f32 to vector<8x128xf32>
    %92 = arith.addf %91, %90 : vector<8x128xf32>
    %93 = arith.divf %91, %92 : vector<8x128xf32>
    %94 = vector.extract_strided_slice %87 {offsets = [0, 128], sizes = [8, 128], strides = [1, 1]} : vector<8x512xf32> to vector<8x128xf32>
    %95 = arith.negf %94 : vector<8x128xf32>
    %96 = math.exp %95 : vector<8x128xf32>
    %cst_27 = arith.constant 1.000000e+00 : f32
    %97 = vector.broadcast %cst_27 : f32 to vector<8x128xf32>
    %98 = arith.addf %97, %96 : vector<8x128xf32>
    %99 = arith.divf %97, %98 : vector<8x128xf32>
    %100 = vector.extract_strided_slice %87 {offsets = [0, 256], sizes = [8, 128], strides = [1, 1]} : vector<8x512xf32> to vector<8x128xf32>
    %101 = math.tanh %100 : vector<8x128xf32>
    %102 = vector.extract_strided_slice %87 {offsets = [0, 384], sizes = [8, 128], strides = [1, 1]} : vector<8x512xf32> to vector<8x128xf32>
    %103 = arith.negf %102 : vector<8x128xf32>
    %104 = math.exp %103 : vector<8x128xf32>
    %cst_28 = arith.constant 1.000000e+00 : f32
    %105 = vector.broadcast %cst_28 : f32 to vector<8x128xf32>
    %106 = arith.addf %105, %104 : vector<8x128xf32>
    %107 = arith.divf %105, %106 : vector<8x128xf32>
    %108 = arith.mulf %99, %74 : vector<8x128xf32>
    %109 = arith.mulf %93, %101 : vector<8x128xf32>
    %110 = arith.addf %108, %109 : vector<8x128xf32>
    %111 = math.tanh %110 : vector<8x128xf32>
    %112 = arith.mulf %107, %111 : vector<8x128xf32>
    %113 = arith.addi %7, %c2_i32 : i32
    %114 = vector.broadcast %113 : i32 to vector<8x1xi32>
    %115 = arith.cmpi eq, %6, %114 : vector<8x1xi32>
    %116 = vector.shape_cast %115 : vector<8x1xi1> to vector<8x1xi1>
    %117 = vector.broadcast %116 : vector<8x1xi1> to vector<8x128xi1>
    %118 = arith.select %117, %112, %82 : vector<8x128xi1>, vector<8x128xf32>
    %c3_i32 = arith.constant 3 : i32
    %119 = arith.index_cast %c3_i32 : i32 to index
    %c0_29 = arith.constant 0 : index
    %c0_30 = arith.constant 0 : index
    %120 = vector.load %arg3[%119, %c0_29, %c0_30] : memref<4x8x512xf32, #tpu.memory_space<vmem>>, vector<1x8x512xf32>
    %121 = vector.shape_cast %120 : vector<1x8x512xf32> to vector<8x512xf32>
    %cst_31 = arith.constant dense<0.000000e+00> : vector<8x512xf32>
    %122 = tpu.matmul %112, %3, %cst_31 {dimension_numbers = #tpu.dot_dimension_numbers<[1], [0], [0], [1], [0, 0, 1, 1], [], []>} : vector<8x128xf32>, vector<128x512xf32>, vector<8x512xf32> -> vector<8x512xf32>
    %123 = arith.addf %121, %122 : vector<8x512xf32>
    %124 = vector.extract_strided_slice %123 {offsets = [0, 0], sizes = [8, 128], strides = [1, 1]} : vector<8x512xf32> to vector<8x128xf32>
    %125 = arith.negf %124 : vector<8x128xf32>
    %126 = math.exp %125 : vector<8x128xf32>
    %cst_32 = arith.constant 1.000000e+00 : f32
    %127 = vector.broadcast %cst_32 : f32 to vector<8x128xf32>
    %128 = arith.addf %127, %126 : vector<8x128xf32>
    %129 = arith.divf %127, %128 : vector<8x128xf32>
    %130 = vector.extract_strided_slice %123 {offsets = [0, 128], sizes = [8, 128], strides = [1, 1]} : vector<8x512xf32> to vector<8x128xf32>
    %131 = arith.negf %130 : vector<8x128xf32>
    %132 = math.exp %131 : vector<8x128xf32>
    %cst_33 = arith.constant 1.000000e+00 : f32
    %133 = vector.broadcast %cst_33 : f32 to vector<8x128xf32>
    %134 = arith.addf %133, %132 : vector<8x128xf32>
    %135 = arith.divf %133, %134 : vector<8x128xf32>
    %136 = vector.extract_strided_slice %123 {offsets = [0, 256], sizes = [8, 128], strides = [1, 1]} : vector<8x512xf32> to vector<8x128xf32>
    %137 = math.tanh %136 : vector<8x128xf32>
    %138 = vector.extract_strided_slice %123 {offsets = [0, 384], sizes = [8, 128], strides = [1, 1]} : vector<8x512xf32> to vector<8x128xf32>
    %139 = arith.negf %138 : vector<8x128xf32>
    %140 = math.exp %139 : vector<8x128xf32>
    %cst_34 = arith.constant 1.000000e+00 : f32
    %141 = vector.broadcast %cst_34 : f32 to vector<8x128xf32>
    %142 = arith.addf %141, %140 : vector<8x128xf32>
    %143 = arith.divf %141, %142 : vector<8x128xf32>
    %144 = arith.mulf %135, %110 : vector<8x128xf32>
    %145 = arith.mulf %129, %137 : vector<8x128xf32>
    %146 = arith.addf %144, %145 : vector<8x128xf32>
    %147 = math.tanh %146 : vector<8x128xf32>
    %148 = arith.mulf %143, %147 : vector<8x128xf32>
    %149 = arith.addi %7, %c3_i32 : i32
    %150 = vector.broadcast %149 : i32 to vector<8x1xi32>
    %151 = arith.cmpi eq, %6, %150 : vector<8x1xi32>
    %152 = vector.shape_cast %151 : vector<8x1xi1> to vector<8x1xi1>
    %153 = vector.broadcast %152 : vector<8x1xi1> to vector<8x128xi1>
    %154 = arith.select %153, %148, %118 : vector<8x128xi1>, vector<8x128xf32>
    %c4_i32_35 = arith.constant 4 : i32
    %c0_36 = arith.constant 0 : index
    %c0_37 = arith.constant 0 : index
    %155 = vector.load %arg6[%c0_36, %c0_37] : memref<8x128xf32, #tpu.memory_space<vmem>>, vector<8x128xf32>
    tpu.vector_store %arg6[%c0_36, %c0_37], %148 {strides = array<i32>} : memref<8x128xf32, #tpu.memory_space<vmem>>, vector<8x128xf32>,
    %c0_38 = arith.constant 0 : index
    %c0_39 = arith.constant 0 : index
    %156 = vector.load %arg7[%c0_38, %c0_39] : memref<8x128xf32, #tpu.memory_space<vmem>>, vector<8x128xf32>
    tpu.vector_store %arg7[%c0_38, %c0_39], %146 {strides = array<i32>} : memref<8x128xf32, #tpu.memory_space<vmem>>, vector<8x128xf32>,
    %c0_40 = arith.constant 0 : index
    %c0_41 = arith.constant 0 : index
    %157 = vector.load %arg5[%c0_40, %c0_41] : memref<8x128xf32, #tpu.memory_space<vmem>>, vector<8x128xf32>
    tpu.vector_store %arg5[%c0_40, %c0_41], %154 {strides = array<i32>} : memref<8x128xf32, #tpu.memory_space<vmem>>, vector<8x128xf32>,
    return
  }
  func.func @transform_0(%arg0: i32, %arg1: i32) -> (i32, i32) {
    %c0_i32 = arith.constant 0 : i32
    %c0_i32_0 = arith.constant 0 : i32
    return %arg0, %c0_i32 : i32, i32
  }
  func.func @transform_1(%arg0: i32, %arg1: i32) -> (i32, i32, i32) {
    %c0_i32 = arith.constant 0 : i32
    %c0_i32_0 = arith.constant 0 : i32
    return %arg1, %arg0, %c0_i32 : i32, i32, i32
  }
  func.func @transform_2(%arg0: i32, %arg1: i32) -> (i32, i32) {
    %c0_i32 = arith.constant 0 : i32
    %c0_i32_0 = arith.constant 0 : i32
    %c0_i32_1 = arith.constant 0 : i32
    return %c0_i32, %c0_i32_0 : i32, i32
  }
  func.func @transform_3(%arg0: i32, %arg1: i32) -> (i32, i32) {
    %c0_i32 = arith.constant 0 : i32
    %c0_i32_0 = arith.constant 0 : i32
    return %arg0, %c0_i32 : i32, i32
  }
}

</mosaic_0001>

<llo_original>
// kernel: tpu_custom_call.1
$region0: #{tpu_custom_call.1}
  #allocation0 [shape = 'u32[]', space=smem, size = 0x4, offset = 0x4, fixed_abs, tag = 'smem constant byte address 0x4 - core index']
  #allocation1 [shape = 'u32[72,128]{1,0:T(1,128)}', space=vmem, size = 0x9000, scoped, tag = 'internal scratch']
  #allocation2 [shape = 'f32[8,128]{1,0:T(8,128)}', space=vmem, size = 0x1000, scoped, tag = 'scratch operand']
  #allocation3 [shape = 'f32[8,128]{1,0:T(8,128)}', space=vmem, size = 0x1000, scoped, tag = 'scratch operand']
  %s0 = inlined_call_operand.vmem [shape: s32[8,1], index: 0, kind: input, shape index: {}]
  %s1 = inlined_call_operand.hbm [shape: f32[8,8,512], index: 1, kind: input, shape index: {}]
  %s2 = inlined_call_operand.hbm [shape: f32[128,512], index: 2, kind: input, shape index: {}]
  %s3 = inlined_call_operand.hbm [shape: f32[8,128], index: 3, kind: output, shape index: {}]
  %s4 = sld [smem:[#allocation0]]
  $region57: #{tpu_custom_call.1} parent=0
    _
  %s6 = ssub.s32 1, %s4
  %s7 = scalar_select 0, %s6, %s4
  $region1: #{tpu_custom_call.1} parent=0
    #allocation4 [shape = 'u8[131072]{0}', space=vmem, size = 0x20000, scoped, tag = 'input window, operand 1']
    #allocation5 [shape = 's32[2]{0}', space=sflag, size = 0x8, scoped, tag = 'scoped memory for tpu_custom_call.1']
    #allocation6 [shape = 's32[2]{0}', space=sflag, size = 0x8, scoped, tag = 'scoped memory for tpu_custom_call.1']
    #allocation7 [shape = 'u8[262144]{0}', space=vmem, size = 0x40000, scoped, tag = 'input window, operand 2, single buffered']
    #allocation8 [shape = 's32[1]{0}', space=sflag, size = 0x4, scoped, tag = 'scoped memory for tpu_custom_call.1']
    #allocation9 [shape = 'u8[4096]{0}', space=vmem, size = 0x1000, scoped, tag = 'output window, operand 0, single buffered']
    %8 = vsyncpa [#allocation5], 0
    %s9 = scalar_lea.sflag [#allocation5], 1
    %10 = vsyncpa %s9, 0
    %11 = vsyncpa [#allocation8], 0
    %12 = vsyncpa [#allocation6], 0
    loop: start=0, step=1, limit=4
    $region2: #{tpu_custom_call.1} parent=1 // loop_pre_header
      _
    $region3: #{tpu_custom_call.1} parent=1 // loop_header
      %s14 = sphi 0, %s18
      %p15 = scmp.ge.s32.totalorder %s14, 4
      %s21 = sphi 0, %s33
      %s22 = sphi 0, %s29
      %s23 = sphi 0, %s21
      %s24 = sphi 0, %s22
      %s25 = sphi 0, %s23
      %s26 = sphi 0, %s24
      %s36 = sphi 0, %s38
      %s39 = sphi 0, %s36
      %s40 = sphi 0, %s39
      %s56 = sphi 0, %s40
      %s64 = sphi 0, %s66
      %s67 = sphi 0, %s64
      %s68 = sphi 0, %s67
      %s84 = sphi 0, %s68
      %s88 = sphi 0, %s88
      %s90 = sphi 0, %s88
      %s91 = sphi 0, %s90
      %s105 = sphi 0, %s91
      %s111 = sphi 0, %s113
      %s114 = sphi 0, %s111
      %s115 = sphi 0, %s114
      %s131 = sphi 0, %s115
    $region4: #{tpu_custom_call.1} parent=1 // loop_header_branch
      %17 = sbr.rel (%p15) target = $region8
    $region5: #{tpu_custom_call.1} parent=1 // loop_body
      %s19 = ssub.s32 %s14, 1
      %s20 = ssub.s32 %s14, 2
      %s27 = sadd.s32 1, %s22
      %p28 = scmp.ge.s32.totalorder %s27, 2
      %s29 = scalar_select %p28, 0, %s27
      %s30 = sadd.s32 1, %s21
      %s31 = scalar_select %p28, %s30, %s21
      %p32 = scmp.ge.s32.totalorder %s31, 1
      %s33 = scalar_select %p32, 0, %s31
      %s34 = ssub.s32 %s21, %s33
      %p35 = scmp.eq.s32.totalorder %s34, 0
      %s37 = sadd.s32 %s36, 1
      %s38 = scalar_select %p35, %s36, %s37
      %p41 = pneg %p35
      %p42 = scmp.eq.s32.totalorder %s14, 1
      %p43 = por %p41, %p42
      %p44 = scmp.ne.s32.totalorder %s36, %s39
      %p45 = scmp.eq.s32.totalorder %s14, 0
      %p46 = por %p44, %p45
      %p47 = scmp.ne.s32.totalorder %s36, %s39
      %p48 = scmp.eq.s32.totalorder %s19, 1
      %p49 = por %p47, %p48
      %p50 = scmp.ne.s32.totalorder %s39, %s40
      %p51 = scmp.eq.s32.totalorder %s19, 0
      %p52 = por %p50, %p51
      %p53 = scmp.ne.s32.totalorder %s39, %s40
      %p54 = scmp.eq.s32.totalorder %s20, 1
      %p55 = por %p53, %p54
      %p57 = scmp.ne.s32.totalorder %s40, %s56
      %p58 = scmp.eq.s32.totalorder %s20, 0
      %p59 = por %p57, %p58
      %s60 = ssub.s32 %s22, %s29
      %s61 = ssub.s32 %s21, %s33
      %s62 = sor.u32 %s60, %s61
      %p63 = scmp.eq.s32.totalorder %s62, 0
      %s65 = sadd.s32 %s64, 1
      %s66 = scalar_select %p63, %s64, %s65
      %p69 = pneg %p63
      %p70 = scmp.eq.s32.totalorder %s14, 1
      %p71 = por %p69, %p70
      %p72 = scmp.ne.s32.totalorder %s64, %s67
      %p73 = scmp.eq.s32.totalorder %s14, 0
      %p74 = por %p72, %p73
      %p75 = scmp.ne.s32.totalorder %s64, %s67
      %p76 = scmp.eq.s32.totalorder %s19, 1
      %p77 = por %p75, %p76
      %p78 = scmp.ne.s32.totalorder %s67, %s68
      %p79 = scmp.eq.s32.totalorder %s19, 0
      %p80 = por %p78, %p79
      %p81 = scmp.ne.s32.totalorder %s67, %s68
      %p82 = scmp.eq.s32.totalorder %s20, 1
      %p83 = por %p81, %p82
      %p85 = scmp.ne.s32.totalorder %s68, %s84
      %p86 = scmp.eq.s32.totalorder %s20, 0
      %p87 = por %p85, %p86
      %s89 = sadd.s32 %s88, 1
      %p92 = scmp.eq.s32.totalorder %s14, 1
      %p93 = scmp.ne.s32.totalorder %s88, %s90
      %p94 = scmp.eq.s32.totalorder %s14, 0
      %p95 = por %p93, %p94
      %p96 = scmp.ne.s32.totalorder %s88, %s90
      %p97 = scmp.eq.s32.totalorder %s19, 1
      %p98 = por %p96, %p97
      %p99 = scmp.ne.s32.totalorder %s90, %s91
      %p100 = scmp.eq.s32.totalorder %s19, 0
      %p101 = por %p99, %p100
      %p102 = scmp.ne.s32.totalorder %s90, %s91
      %p103 = scmp.eq.s32.totalorder %s20, 1
      %p104 = por %p102, %p103
      %p106 = scmp.ne.s32.totalorder %s91, %s105
      %p107 = scmp.eq.s32.totalorder %s20, 0
      %p108 = por %p106, %p107
      %s109 = ssub.s32 %s21, %s33
      %p110 = scmp.eq.s32.totalorder %s109, 0
      %s112 = sadd.s32 %s111, 1
      %s113 = scalar_select %p110, %s111, %s112
      %p116 = pneg %p110
      %p117 = scmp.eq.s32.totalorder %s14, 1
      %p118 = por %p116, %p117
      %p119 = scmp.ne.s32.totalorder %s111, %s114
      %p120 = scmp.eq.s32.totalorder %s14, 0
      %p121 = por %p119, %p120
      %p122 = scmp.ne.s32.totalorder %s111, %s114
      %p123 = scmp.eq.s32.totalorder %s19, 1
      %p124 = por %p122, %p123
      %p125 = scmp.ne.s32.totalorder %s114, %s115
      %p126 = scmp.eq.s32.totalorder %s19, 0
      %p127 = por %p125, %p126
      %p128 = scmp.ne.s32.totalorder %s114, %s115
      %p129 = scmp.eq.s32.totalorder %s20, 1
      %p130 = por %p128, %p129
      %p132 = scmp.ne.s32.totalorder %s115, %s131
      %p133 = scmp.eq.s32.totalorder %s20, 0
      %p134 = por %p132, %p133
      %p135 = scmp.le.s32.totalorder 1, %s14
      %p136 = scmp.lt.s32.totalorder %s14, 3
      %p137 = pnand %p135, %p136
      %p138 = pneg %p137
      // Predicated region
      $region9: #{tpu_custom_call.1} parent=5 // pred_check
        _
      $region10: #{tpu_custom_call.1} parent=5 // pred_check_branch
        %140 = sbr.rel (%p137) target = $region12
      $region11: #{tpu_custom_call.1} parent=5 // pred_region
        %s141 = ssub.s32 %s14, 1
        // Predicated region
        $region13: #{tpu_custom_call.1} parent=11 // pred_check
          %p142 = pneg %p52
        $region14: #{tpu_custom_call.1} parent=11 // pred_check_branch
          %144 = sbr.rel (%p142) target = $region16
        $region15: #{tpu_custom_call.1} parent=11 // pred_region
          %p145 = scmp.lt.s32.totalorder %s23, 0
          %s146 = scalar_select %p145, %s23, 0
          %s147 = smul.addr %s146, 8
          %s148 = scalar_lea.vmem %s0, %s147
        $region16: #{tpu_custom_call.1} parent=11 // pred_fallthru
          _
        // Predicated region
        $region17: #{tpu_custom_call.1} parent=11 // pred_check
          %p149 = pneg %p101
        $region18: #{tpu_custom_call.1} parent=11 // pred_check_branch
          %151 = sbr.rel (%p149) target = $region20
        $region19: #{tpu_custom_call.1} parent=11 // pred_region
          %153 = vsyncadd [#allocation8], 0
          %s154 = sshll.u32 %s2, 4
          %s155 = int_to_ptr.hbm [resolvable:$true] %s154
          %s156 = sshll.u32 [#allocation7], 4
          %s157 = int_to_ptr.vmem [resolvable:$true] %s156
          %162 = dma.hbm_to_vmem [thread:$0]  %s155, 8192, %s157, [#allocation8], 512, 512, 32
        $region20: #{tpu_custom_call.1} parent=11 // pred_fallthru
          _
      $region12: #{tpu_custom_call.1} parent=5 // pred_fallthru
        _
      %p163 = scmp.lt.s32.totalorder %s14, 2
      // Predicated region
      $region21: #{tpu_custom_call.1} parent=5 // pred_check
        %p164 = pneg %p163
      $region22: #{tpu_custom_call.1} parent=5 // pred_check_branch
        %166 = sbr.rel (%p164) target = $region24
      $region23: #{tpu_custom_call.1} parent=5 // pred_region
        // Predicated region
        $region25: #{tpu_custom_call.1} parent=23 // pred_check
          %p167 = pneg %p74
        $region26: #{tpu_custom_call.1} parent=23 // pred_check_branch
          %169 = sbr.rel (%p167) target = $region28
        $region27: #{tpu_custom_call.1} parent=23 // pred_region
          %s170 = sand.u32 %s64, 1
          %s171 = scalar_lea.sflag [#allocation5], %s170
          %s172 = sand.u32 %s64, 1
          %s173 = smul.addr %s172, 128
          %s174 = scalar_lea.vmem [#allocation4], %s173
          %s175 = smul.u32 4, %s22
          %177 = vsyncadd %s171, 0
          %s178 = smul.addr %s21, 4
          %s179 = smul.addr %s175, 4
          %s180 = sadd.s32 %s178, %s179
          %s181 = smul.addr %s180, 8
          %s182 = scalar_lea.hbm %s1, %s181
          %s183 = sshll.u32 %s182, 4
          %s184 = int_to_ptr.hbm [resolvable:$true] %s183
          %s185 = sshll.u32 %s174, 4
          %s186 = int_to_ptr.vmem [resolvable:$true] %s185
          %191 = dma.hbm_to_vmem [thread:$0]  %s184, 2048, %s186, %s171, 512, 512, 32
        $region28: #{tpu_custom_call.1} parent=23 // pred_fallthru
          _
      $region24: #{tpu_custom_call.1} parent=5 // pred_fallthru
        _
      %p192 = scmp.le.s32.totalorder 1, %s14
      %p193 = scmp.lt.s32.totalorder %s14, 3
      %p194 = pnand %p192, %p193
      %p195 = pneg %p194
      // Predicated region
      $region29: #{tpu_custom_call.1} parent=5 // pred_check
        _
      $region30: #{tpu_custom_call.1} parent=5 // pred_check_branch
        %197 = sbr.rel (%p194) target = $region32
      $region31: #{tpu_custom_call.1} parent=5 // pred_region
        %s198 = ssub.s32 %s14, 1
        %s199 = sand.u32 %s67, 1
        %s200 = scalar_lea.sflag [#allocation5], %s199
        %s201 = sand.u32 %s67, 1
        %s202 = smul.addr %s201, 128
        %s203 = scalar_lea.vmem [#allocation4], %s202
        // Predicated region
        $region33: #{tpu_custom_call.1} parent=31 // pred_check
          %p204 = pneg %p80
        $region34: #{tpu_custom_call.1} parent=31 // pred_check_branch
          %206 = sbr.rel (%p204) target = $region36
        $region35: #{tpu_custom_call.1} parent=31 // pred_region
          %208 = dma.done %s200, 2048
        $region36: #{tpu_custom_call.1} parent=31 // pred_fallthru
          _
        // Predicated region
        $region37: #{tpu_custom_call.1} parent=31 // pred_check
          %p209 = pneg %p101
        $region38: #{tpu_custom_call.1} parent=31 // pred_check_branch
          %211 = sbr.rel (%p209) target = $region40
        $region39: #{tpu_custom_call.1} parent=31 // pred_region
          %213 = dma.done [#allocation8], 8192
        $region40: #{tpu_custom_call.1} parent=31 // pred_fallthru
          _
        %p214 = scmp.lt.s32.totalorder %s23, 0
        %s215 = scalar_select %p214, %s23, 0
        %s216 = smul.addr %s215, 8
        %s217 = scalar_lea.vmem %s0, %s216
        %p218 = pneg %p52
        %p219 = pneg %p49
        %s220 = sand.u32 %s67, 1
        %s221 = scalar_lea.sflag [#allocation5], %s220
        %s222 = sand.u32 %s67, 1
        %s223 = smul.addr %s222, 128
        %s224 = scalar_lea.vmem [#allocation4], %s223
        %p225 = pneg %p80
        %p226 = pneg %p77
        %p227 = pneg %p101
        %p228 = pneg %p98
        %p229 = pneg %p127
        %p230 = pneg %p124
        %p231 = scmp.lt.s32.totalorder %s23, 0
        %s232 = scalar_select %p231, %s23, 0
        %s233 = smul.addr %s232, 8
        %s234 = scalar_lea.vmem %s0, %s233
        %s235 = smul.u32 4, %s24
        %p236 = scmp.eq.s32.totalorder %s24, 0
        // Predicated region
        $region41: #{tpu_custom_call.1} parent=31 // pred_check
          %p237 = pneg %p236
        $region42: #{tpu_custom_call.1} parent=31 // pred_check_branch
          %239 = sbr.rel (%p237) target = $region44
        $region43: #{tpu_custom_call.1} parent=31 // pred_region
          %240 = vst [vmem:[#allocation2] sm:$0xff] 0.0
          %241 = vst [vmem:[#allocation3] sm:$0xff] 0.0
          %242 = vst [vmem:[#allocation9] sm:$0xff] 0.0
        $region44: #{tpu_custom_call.1} parent=31 // pred_fallthru
          _
        %v243 = vld [vmem:[#allocation7] sm:$0xff]
        %v244 = vld [vmem:[#allocation7 + $0x8] sm:$0xff]
        %v245 = vld [vmem:[#allocation7 + $0x10] sm:$0xff]
        %v246 = vld [vmem:[#allocation7 + $0x18] sm:$0xff]
        %v247 = vld [vmem:[#allocation7 + $0x20] sm:$0xff]
        %v248 = vld [vmem:[#allocation7 + $0x28] sm:$0xff]
        %v249 = vld [vmem:[#allocation7 + $0x30] sm:$0xff]
        %v250 = vld [vmem:[#allocation7 + $0x38] sm:$0xff]
        %v251 = vld [vmem:[#allocation7 + $0x40] sm:$0xff]
        %v252 = vld [vmem:[#allocation7 + $0x48] sm:$0xff]
        %v253 = vld [vmem:[#allocation7 + $0x50] sm:$0xff]
        %v254 = vld [vmem:[#allocation7 + $0x58] sm:$0xff]
        %v255 = vld [vmem:[#allocation7 + $0x60] sm:$0xff]
        %v256 = vld [vmem:[#allocation7 + $0x68] sm:$0xff]
        %v257 = vld [vmem:[#allocation7 + $0x70] sm:$0xff]
        %v258 = vld [vmem:[#allocation7 + $0x78] sm:$0xff]
        %v259 = vld [vmem:[#allocation7 + $0x80] sm:$0xff]
        %v260 = vld [vmem:[#allocation7 + $0x88] sm:$0xff]
        %v261 = vld [vmem:[#allocation7 + $0x90] sm:$0xff]
        %v262 = vld [vmem:[#allocation7 + $0x98] sm:$0xff]
        %v263 = vld [vmem:[#allocation7 + $0xa0] sm:$0xff]
        %v264 = vld [vmem:[#allocation7 + $0xa8] sm:$0xff]
        %v265 = vld [vmem:[#allocation7 + $0xb0] sm:$0xff]
        %v266 = vld [vmem:[#allocation7 + $0xb8] sm:$0xff]
        %v267 = vld [vmem:[#allocation7 + $0xc0] sm:$0xff]
        %v268 = vld [vmem:[#allocation7 + $0xc8] sm:$0xff]
        %v269 = vld [vmem:[#allocation7 + $0xd0] sm:$0xff]
        %v270 = vld [vmem:[#allocation7 + $0xd8] sm:$0xff]
        %v271 = vld [vmem:[#allocation7 + $0xe0] sm:$0xff]
        %v272 = vld [vmem:[#allocation7 + $0xe8] sm:$0xff]
        %v273 = vld [vmem:[#allocation7 + $0xf0] sm:$0xff]
        %v274 = vld [vmem:[#allocation7 + $0xf8] sm:$0xff]
        %v275 = vld [vmem:[#allocation7 + $0x100] sm:$0xff]
        %v276 = vld [vmem:[#allocation7 + $0x108] sm:$0xff]
        %v277 = vld [vmem:[#allocation7 + $0x110] sm:$0xff]
        %v278 = vld [vmem:[#allocation7 + $0x118] sm:$0xff]
        %v279 = vld [vmem:[#allocation7 + $0x120] sm:$0xff]
        %v280 = vld [vmem:[#allocation7 + $0x128] sm:$0xff]
        %v281 = vld [vmem:[#allocation7 + $0x130] sm:$0xff]
        %v282 = vld [vmem:[#allocation7 + $0x138] sm:$0xff]
        %v283 = vld [vmem:[#allocation7 + $0x140] sm:$0xff]
        %v284 = vld [vmem:[#allocation7 + $0x148] sm:$0xff]
        %v285 = vld [vmem:[#allocation7 + $0x150] sm:$0xff]
        %v286 = vld [vmem:[#allocation7 + $0x158] sm:$0xff]
        %v287 = vld [vmem:[#allocation7 + $0x160] sm:$0xff]
        %v288 = vld [vmem:[#allocation7 + $0x168] sm:$0xff]
        %v289 = vld [vmem:[#allocation7 + $0x170] sm:$0xff]
        %v290 = vld [vmem:[#allocation7 + $0x178] sm:$0xff]
        %v291 = vld [vmem:[#allocation7 + $0x180] sm:$0xff]
        %v292 = vld [vmem:[#allocation7 + $0x188] sm:$0xff]
        %v293 = vld [vmem:[#allocation7 + $0x190] sm:$0xff]
        %v294 = vld [vmem:[#allocation7 + $0x198] sm:$0xff]
        %v295 = vld [vmem:[#allocation7 + $0x1a0] sm:$0xff]
        %v296 = vld [vmem:[#allocation7 + $0x1a8] sm:$0xff]
        %v297 = vld [vmem:[#allocation7 + $0x1b0] sm:$0xff]
        %v298 = vld [vmem:[#allocation7 + $0x1b8] sm:$0xff]
        %v299 = vld [vmem:[#allocation7 + $0x1c0] sm:$0xff]
        %v300 = vld [vmem:[#allocation7 + $0x1c8] sm:$0xff]
        %v301 = vld [vmem:[#allocation7 + $0x1d0] sm:$0xff]
        %v302 = vld [vmem:[#allocation7 + $0x1d8] sm:$0xff]
        %v303 = vld [vmem:[#allocation7 + $0x1e0] sm:$0xff]
        %v304 = vld [vmem:[#allocation7 + $0x1e8] sm:$0xff]
        %v305 = vld [vmem:[#allocation7 + $0x1f0] sm:$0xff]
        %v306 = vld [vmem:[#allocation7 + $0x1f8] sm:$0xff]
        %v307 = vld [vmem:[%s234] sm:$0xff]
        %v308 = vsub.s32 %v307, 1
        %s309 = smul.u32 %s24, 4
        %v310 = vld [vmem:[#allocation2] sm:$0xff]
        %v311 = vld [vmem:[#allocation3] sm:$0xff]
        %v312 = vld [vmem:[#allocation9] sm:$0xff]
        %v313 = vld [vmem:[%s203] sm:$0xff]
        %v314 = vld [vmem:[%s203 + $0x8] sm:$0xff]
        %v315 = vld [vmem:[%s203 + $0x10] sm:$0xff]
        %v316 = vld [vmem:[%s203 + $0x18] sm:$0xff]
        %317 = vmatpush.msra.mxu0 %v303
        %318 = vmatpush.msra.mxu0 %v299
        %319 = vmatpush.msra.mxu0 %v295
        %320 = vmatpush.msra.mxu0 %v291
        %321 = vmatpush.msra.mxu0 %v287
        %322 = vmatpush.msra.mxu0 %v283
        %323 = vmatpush.msra.mxu0 %v279
        %324 = vmatpush.msra.mxu0 %v275
        %325 = vmatpush.msra.mxu0 %v271
        %326 = vmatpush.msra.mxu0 %v267
        %327 = vmatpush.msra.mxu0 %v263
        %328 = vmatpush.msra.mxu0 %v259
        %329 = vmatpush.msra.mxu0 %v255
        %330 = vmatpush.msra.mxu0 %v251
        %331 = vmatpush.msra.mxu0 %v247
        %332 = vmatpush.msra.mxu0 %v243
        %333 = vmatmul.f32.gmra.mxu0 %v310
        %v334 = vpop.f32.mrf.mxu0
        %v335 = vadd.f32 0.0, %v334
        %336 = vdwg.mxu0
        %337 = vmatpush.msra.mxu0 %v304
        %338 = vmatpush.msra.mxu0 %v300
        %339 = vmatpush.msra.mxu0 %v296
        %340 = vmatpush.msra.mxu0 %v292
        %341 = vmatpush.msra.mxu0 %v288
        %342 = vmatpush.msra.mxu0 %v284
        %343 = vmatpush.msra.mxu0 %v280
        %344 = vmatpush.msra.mxu0 %v276
        %345 = vmatpush.msra.mxu0 %v272
        %346 = vmatpush.msra.mxu0 %v268
        %347 = vmatpush.msra.mxu0 %v264
        %348 = vmatpush.msra.mxu0 %v260
        %349 = vmatpush.msra.mxu0 %v256
        %350 = vmatpush.msra.mxu0 %v252
        %351 = vmatpush.msra.mxu0 %v248
        %352 = vmatpush.msra.mxu0 %v244
        %353 = vmatmul.f32.gmra.mxu0 %v310
        %v354 = vpop.f32.mrf.mxu0
        %v355 = vadd.f32 0.0, %v354
        %356 = vdwg.mxu0
        %357 = vmatpush.msra.mxu0 %v305
        %358 = vmatpush.msra.mxu0 %v301
        %359 = vmatpush.msra.mxu0 %v297
        %360 = vmatpush.msra.mxu0 %v293
        %361 = vmatpush.msra.mxu0 %v289
        %362 = vmatpush.msra.mxu0 %v285
        %363 = vmatpush.msra.mxu0 %v281
        %364 = vmatpush.msra.mxu0 %v277
        %365 = vmatpush.msra.mxu0 %v273
        %366 = vmatpush.msra.mxu0 %v269
        %367 = vmatpush.msra.mxu0 %v265
        %368 = vmatpush.msra.mxu0 %v261
        %369 = vmatpush.msra.mxu0 %v257
        %370 = vmatpush.msra.mxu0 %v253
        %371 = vmatpush.msra.mxu0 %v249
        %372 = vmatpush.msra.mxu0 %v245
        %373 = vmatmul.f32.gmra.mxu0 %v310
        %v374 = vpop.f32.mrf.mxu0
        %v375 = vadd.f32 0.0, %v374
        %376 = vdwg.mxu0
        %377 = vmatpush.msra.mxu0 %v306
        %378 = vmatpush.msra.mxu0 %v302
        %379 = vmatpush.msra.mxu0 %v298
        %380 = vmatpush.msra.mxu0 %v294
        %381 = vmatpush.msra.mxu0 %v290
        %382 = vmatpush.msra.mxu0 %v286
        %383 = vmatpush.msra.mxu0 %v282
        %384 = vmatpush.msra.mxu0 %v278
        %385 = vmatpush.msra.mxu0 %v274
        %386 = vmatpush.msra.mxu0 %v270
        %387 = vmatpush.msra.mxu0 %v266
        %388 = vmatpush.msra.mxu0 %v262
        %389 = vmatpush.msra.mxu0 %v258
        %390 = vmatpush.msra.mxu0 %v254
        %391 = vmatpush.msra.mxu0 %v250
        %392 = vmatpush.msra.mxu0 %v246
        %393 = vmatmul.f32.gmra.mxu0 %v310
        %v394 = vpop.f32.mrf.mxu0
        %v395 = vadd.f32 0.0, %v394
        %396 = vdwg.mxu0
        %v397 = vadd.f32 %v313, %v335
        %v398 = vadd.f32 %v314, %v355
        %v399 = vadd.f32 %v315, %v375
        %v400 = vadd.f32 %v316, %v395
        %v401 = vxor.u32 %v397, 2147483648
        %v402 = vmul.f32 %v401, 1.442695
        %v403 = vpow.pop %v402
        %v404 = vadd.f32 %v403, 1.0
        %v405 = vrcp.pop %v404
        %v406 = vmul.f32 %v404, %v405
        %v407 = vsub.f32 1.0, %v406
        %v408 = vmul.f32 %v405, %v407
        %v409 = vadd.f32 %v405, %v408
        %vm410 = vweird.f32 %v404
        %vm411 = vweird.f32 %v405
        %vm412 = vmor %vm410, %vm411
        %v413 = vsel %vm412, %v405, %v409
        %v414 = vand.u32 2147483647, %v404
        %vm415 = vcmp.eq.f32.partialorder %v414, 8.507059e+37
        %v416 = vand.u32 %v404, 2147483648
        %v417 = vor.u32 1.1754944e-38, %v416
        %v418 = vsel %vm415, %v417, %v413
        %v419 = vmul.f32 1.0, %v418
        %v420 = vxor.u32 %v398, 2147483648
        %v421 = vmul.f32 %v420, 1.442695
        %v422 = vpow.pop %v421
        %v423 = vadd.f32 %v422, 1.0
        %v424 = vrcp.pop %v423
        %v425 = vmul.f32 %v423, %v424
        %v426 = vsub.f32 1.0, %v425
        %v427 = vmul.f32 %v424, %v426
        %v428 = vadd.f32 %v424, %v427
        %vm429 = vweird.f32 %v423
        %vm430 = vweird.f32 %v424
        %vm431 = vmor %vm429, %vm430
        %v432 = vsel %vm431, %v424, %v428
        %v433 = vand.u32 2147483647, %v423
        %vm434 = vcmp.eq.f32.partialorder %v433, 8.507059e+37
        %v435 = vand.u32 %v423, 2147483648
        %v436 = vor.u32 1.1754944e-38, %v435
        %v437 = vsel %vm434, %v436, %v432
        %v438 = vmul.f32 1.0, %v437
        %v439 = vtanh.pop %v399
        %v440 = vxor.u32 %v400, 2147483648
        %v441 = vmul.f32 %v440, 1.442695
        %v442 = vpow.pop %v441
        %v443 = vadd.f32 %v442, 1.0
        %v444 = vrcp.pop %v443
        %v445 = vmul.f32 %v443, %v444
        %v446 = vsub.f32 1.0, %v445
        %v447 = vmul.f32 %v444, %v446
        %v448 = vadd.f32 %v444, %v447
        %vm449 = vweird.f32 %v443
        %vm450 = vweird.f32 %v444
        %vm451 = vmor %vm449, %vm450
        %v452 = vsel %vm451, %v444, %v448
        %v453 = vand.u32 2147483647, %v443
        %vm454 = vcmp.eq.f32.partialorder %v453, 8.507059e+37
        %v455 = vand.u32 %v443, 2147483648
        %v456 = vor.u32 1.1754944e-38, %v455
        %v457 = vsel %vm454, %v456, %v452
        %v458 = vmul.f32 1.0, %v457
        %v459 = vmul.f32 %v438, %v311
        %v460 = vmul.f32 %v419, %v439
        %v461 = vadd.f32 %v459, %v460
        %v462 = vtanh.pop %v461
        %v463 = vmul.f32 %v458, %v462
        %v464 = vstv %s309
        %vm465 = vcmp.eq.s32.totalorder %v308, %v464
        %v466 = vsel %vm465, 1, 0
        %467 = vset.pattern.permute.xlu0 0
        %468 = vperm.xlu0 %467, %v466
        %v469 = vpop.permute.xlu0 %468
        %vm470 = vcmp.eq.s32.totalorder %v469, 1
        %v471 = vsel %vm470, %v463, %v312
        %s472 = scalar_lea.vmem %s203, 32 [#allocation4]
        %v473 = vld [vmem:[%s472] sm:$0xff]
        %v474 = vld [vmem:[%s472 + $0x8] sm:$0xff]
        %v475 = vld [vmem:[%s472 + $0x10] sm:$0xff]
        %v476 = vld [vmem:[%s472 + $0x18] sm:$0xff]
        %477 = vmatpush.msra.mxu0 %v303
        %478 = vmatpush.msra.mxu0 %v299
        %479 = vmatpush.msra.mxu0 %v295
        %480 = vmatpush.msra.mxu0 %v291
        %481 = vmatpush.msra.mxu0 %v287
        %482 = vmatpush.msra.mxu0 %v283
        %483 = vmatpush.msra.mxu0 %v279
        %484 = vmatpush.msra.mxu0 %v275
        %485 = vmatpush.msra.mxu0 %v271
        %486 = vmatpush.msra.mxu0 %v267
        %487 = vmatpush.msra.mxu0 %v263
        %488 = vmatpush.msra.mxu0 %v259
        %489 = vmatpush.msra.mxu0 %v255
        %490 = vmatpush.msra.mxu0 %v251
        %491 = vmatpush.msra.mxu0 %v247
        %492 = vmatpush.msra.mxu0 %v243
        %493 = vmatmul.f32.gmra.mxu0 %v463
        %v494 = vpop.f32.mrf.mxu0
        %v495 = vadd.f32 0.0, %v494
        %496 = vdwg.mxu0
        %497 = vmatpush.msra.mxu0 %v304
        %498 = vmatpush.msra.mxu0 %v300
        %499 = vmatpush.msra.mxu0 %v296
        %500 = vmatpush.msra.mxu0 %v292
        %501 = vmatpush.msra.mxu0 %v288
        %502 = vmatpush.msra.mxu0 %v284
        %503 = vmatpush.msra.mxu0 %v280
        %504 = vmatpush.msra.mxu0 %v276
        %505 = vmatpush.msra.mxu0 %v272
        %506 = vmatpush.msra.mxu0 %v268
        %507 = vmatpush.msra.mxu0 %v264
        %508 = vmatpush.msra.mxu0 %v260
        %509 = vmatpush.msra.mxu0 %v256
        %510 = vmatpush.msra.mxu0 %v252
        %511 = vmatpush.msra.mxu0 %v248
        %512 = vmatpush.msra.mxu0 %v244
        %513 = vmatmul.f32.gmra.mxu0 %v463
        %v514 = vpop.f32.mrf.mxu0
        %v515 = vadd.f32 0.0, %v514
        %516 = vdwg.mxu0
        %517 = vmatpush.msra.mxu0 %v305
        %518 = vmatpush.msra.mxu0 %v301
        %519 = vmatpush.msra.mxu0 %v297
        %520 = vmatpush.msra.mxu0 %v293
        %521 = vmatpush.msra.mxu0 %v289
        %522 = vmatpush.msra.mxu0 %v285
        %523 = vmatpush.msra.mxu0 %v281
        %524 = vmatpush.msra.mxu0 %v277
        %525 = vmatpush.msra.mxu0 %v273
        %526 = vmatpush.msra.mxu0 %v269
        %527 = vmatpush.msra.mxu0 %v265
        %528 = vmatpush.msra.mxu0 %v261
        %529 = vmatpush.msra.mxu0 %v257
        %530 = vmatpush.msra.mxu0 %v253
        %531 = vmatpush.msra.mxu0 %v249
        %532 = vmatpush.msra.mxu0 %v245
        %533 = vmatmul.f32.gmra.mxu0 %v463
        %v534 = vpop.f32.mrf.mxu0
        %v535 = vadd.f32 0.0, %v534
        %536 = vdwg.mxu0
        %537 = vmatpush.msra.mxu0 %v306
        %538 = vmatpush.msra.mxu0 %v302
        %539 = vmatpush.msra.mxu0 %v298
        %540 = vmatpush.msra.mxu0 %v294
        %541 = vmatpush.msra.mxu0 %v290
        %542 = vmatpush.msra.mxu0 %v286
        %543 = vmatpush.msra.mxu0 %v282
        %544 = vmatpush.msra.mxu0 %v278
        %545 = vmatpush.msra.mxu0 %v274
        %546 = vmatpush.msra.mxu0 %v270
        %547 = vmatpush.msra.mxu0 %v266
        %548 = vmatpush.msra.mxu0 %v262
        %549 = vmatpush.msra.mxu0 %v258
        %550 = vmatpush.msra.mxu0 %v254
        %551 = vmatpush.msra.mxu0 %v250
        %552 = vmatpush.msra.mxu0 %v246
        %553 = vmatmul.f32.gmra.mxu0 %v463
        %v554 = vpop.f32.mrf.mxu0
        %v555 = vadd.f32 0.0, %v554
        %556 = vdwg.mxu0
        %v557 = vadd.f32 %v473, %v495
        %v558 = vadd.f32 %v474, %v515
        %v559 = vadd.f32 %v475, %v535
        %v560 = vadd.f32 %v476, %v555
        %v561 = vxor.u32 %v557, 2147483648
        %v562 = vmul.f32 %v561, 1.442695
        %v563 = vpow.pop %v562
        %v564 = vadd.f32 %v563, 1.0
        %v565 = vrcp.pop %v564
        %v566 = vmul.f32 %v564, %v565
        %v567 = vsub.f32 1.0, %v566
        %v568 = vmul.f32 %v565, %v567
        %v569 = vadd.f32 %v565, %v568
        %vm570 = vweird.f32 %v564
        %vm571 = vweird.f32 %v565
        %vm572 = vmor %vm570, %vm571
        %v573 = vsel %vm572, %v565, %v569
        %v574 = vand.u32 2147483647, %v564
        %vm575 = vcmp.eq.f32.partialorder %v574, 8.507059e+37
        %v576 = vand.u32 %v564, 2147483648
        %v577 = vor.u32 1.1754944e-38, %v576
        %v578 = vsel %vm575, %v577, %v573
        %v579 = vmul.f32 1.0, %v578
        %v580 = vxor.u32 %v558, 2147483648
        %v581 = vmul.f32 %v580, 1.442695
        %v582 = vpow.pop %v581
        %v583 = vadd.f32 %v582, 1.0
        %v584 = vrcp.pop %v583
        %v585 = vmul.f32 %v583, %v584
        %v586 = vsub.f32 1.0, %v585
        %v587 = vmul.f32 %v584, %v586
        %v588 = vadd.f32 %v584, %v587
        %vm589 = vweird.f32 %v583
        %vm590 = vweird.f32 %v584
        %vm591 = vmor %vm589, %vm590
        %v592 = vsel %vm591, %v584, %v588
        %v593 = vand.u32 2147483647, %v583
        %vm594 = vcmp.eq.f32.partialorder %v593, 8.507059e+37
        %v595 = vand.u32 %v583, 2147483648
        %v596 = vor.u32 1.1754944e-38, %v595
        %v597 = vsel %vm594, %v596, %v592
        %v598 = vmul.f32 1.0, %v597
        %v599 = vtanh.pop %v559
        %v600 = vxor.u32 %v560, 2147483648
        %v601 = vmul.f32 %v600, 1.442695
        %v602 = vpow.pop %v601
        %v603 = vadd.f32 %v602, 1.0
        %v604 = vrcp.pop %v603
        %v605 = vmul.f32 %v603, %v604
        %v606 = vsub.f32 1.0, %v605
        %v607 = vmul.f32 %v604, %v606
        %v608 = vadd.f32 %v604, %v607
        %vm609 = vweird.f32 %v603
        %vm610 = vweird.f32 %v604
        %vm611 = vmor %vm609, %vm610
        %v612 = vsel %vm611, %v604, %v608
        %v613 = vand.u32 2147483647, %v603
        %vm614 = vcmp.eq.f32.partialorder %v613, 8.507059e+37
        %v615 = vand.u32 %v603, 2147483648
        %v616 = vor.u32 1.1754944e-38, %v615
        %v617 = vsel %vm614, %v616, %v612
        %v618 = vmul.f32 1.0, %v617
        %v619 = vmul.f32 %v598, %v461
        %v620 = vmul.f32 %v579, %v599
        %v621 = vadd.f32 %v619, %v620
        %v622 = vtanh.pop %v621
        %v623 = vmul.f32 %v618, %v622
        %s624 = sadd.s32 %s309, 1
        %v625 = vstv %s624
        %vm626 = vcmp.eq.s32.totalorder %v308, %v625
        %v627 = vsel %vm626, 1, 0
        %628 = vset.pattern.permute.xlu0 0
        %629 = vperm.xlu0 %628, %v627
        %v630 = vpop.permute.xlu0 %629
        %vm631 = vcmp.eq.s32.totalorder %v630, 1
        %v632 = vsel %vm631, %v623, %v471
        %s633 = scalar_lea.vmem %s203, 64 [#allocation4]
        %v634 = vld [vmem:[%s633] sm:$0xff]
        %v635 = vld [vmem:[%s633 + $0x8] sm:$0xff]
        %v636 = vld [vmem:[%s633 + $0x10] sm:$0xff]
        %v637 = vld [vmem:[%s633 + $0x18] sm:$0xff]
        %638 = vmatpush.msra.mxu0 %v303
        %639 = vmatpush.msra.mxu0 %v299
        %640 = vmatpush.msra.mxu0 %v295
        %641 = vmatpush.msra.mxu0 %v291
        %642 = vmatpush.msra.mxu0 %v287
        %643 = vmatpush.msra.mxu0 %v283
        %644 = vmatpush.msra.mxu0 %v279
        %645 = vmatpush.msra.mxu0 %v275
        %646 = vmatpush.msra.mxu0 %v271
        %647 = vmatpush.msra.mxu0 %v267
        %648 = vmatpush.msra.mxu0 %v263
        %649 = vmatpush.msra.mxu0 %v259
        %650 = vmatpush.msra.mxu0 %v255
        %651 = vmatpush.msra.mxu0 %v251
        %652 = vmatpush.msra.mxu0 %v247
        %653 = vmatpush.msra.mxu0 %v243
        %654 = vmatmul.f32.gmra.mxu0 %v623
        %v655 = vpop.f32.mrf.mxu0
        %v656 = vadd.f32 0.0, %v655
        %657 = vdwg.mxu0
        %658 = vmatpush.msra.mxu0 %v304
        %659 = vmatpush.msra.mxu0 %v300
        %660 = vmatpush.msra.mxu0 %v296
        %661 = vmatpush.msra.mxu0 %v292
        %662 = vmatpush.msra.mxu0 %v288
        %663 = vmatpush.msra.mxu0 %v284
        %664 = vmatpush.msra.mxu0 %v280
        %665 = vmatpush.msra.mxu0 %v276
        %666 = vmatpush.msra.mxu0 %v272
        %667 = vmatpush.msra.mxu0 %v268
        %668 = vmatpush.msra.mxu0 %v264
        %669 = vmatpush.msra.mxu0 %v260
        %670 = vmatpush.msra.mxu0 %v256
        %671 = vmatpush.msra.mxu0 %v252
        %672 = vmatpush.msra.mxu0 %v248
        %673 = vmatpush.msra.mxu0 %v244
        %674 = vmatmul.f32.gmra.mxu0 %v623
        %v675 = vpop.f32.mrf.mxu0
        %v676 = vadd.f32 0.0, %v675
        %677 = vdwg.mxu0
        %678 = vmatpush.msra.mxu0 %v305
        %679 = vmatpush.msra.mxu0 %v301
        %680 = vmatpush.msra.mxu0 %v297
        %681 = vmatpush.msra.mxu0 %v293
        %682 = vmatpush.msra.mxu0 %v289
        %683 = vmatpush.msra.mxu0 %v285
        %684 = vmatpush.msra.mxu0 %v281
        %685 = vmatpush.msra.mxu0 %v277
        %686 = vmatpush.msra.mxu0 %v273
        %687 = vmatpush.msra.mxu0 %v269
        %688 = vmatpush.msra.mxu0 %v265
        %689 = vmatpush.msra.mxu0 %v261
        %690 = vmatpush.msra.mxu0 %v257
        %691 = vmatpush.msra.mxu0 %v253
        %692 = vmatpush.msra.mxu0 %v249
        %693 = vmatpush.msra.mxu0 %v245
        %694 = vmatmul.f32.gmra.mxu0 %v623
        %v695 = vpop.f32.mrf.mxu0
        %v696 = vadd.f32 0.0, %v695
        %697 = vdwg.mxu0
        %698 = vmatpush.msra.mxu0 %v306
        %699 = vmatpush.msra.mxu0 %v302
        %700 = vmatpush.msra.mxu0 %v298
        %701 = vmatpush.msra.mxu0 %v294
        %702 = vmatpush.msra.mxu0 %v290
        %703 = vmatpush.msra.mxu0 %v286
        %704 = vmatpush.msra.mxu0 %v282
        %705 = vmatpush.msra.mxu0 %v278
        %706 = vmatpush.msra.mxu0 %v274
        %707 = vmatpush.msra.mxu0 %v270
        %708 = vmatpush.msra.mxu0 %v266
        %709 = vmatpush.msra.mxu0 %v262
        %710 = vmatpush.msra.mxu0 %v258
        %711 = vmatpush.msra.mxu0 %v254
        %712 = vmatpush.msra.mxu0 %v250
        %713 = vmatpush.msra.mxu0 %v246
        %714 = vmatmul.f32.gmra.mxu0 %v623
        %v715 = vpop.f32.mrf.mxu0
        %v716 = vadd.f32 0.0, %v715
        %717 = vdwg.mxu0
        %v718 = vadd.f32 %v634, %v656
        %v719 = vadd.f32 %v635, %v676
        %v720 = vadd.f32 %v636, %v696
        %v721 = vadd.f32 %v637, %v716
        %v722 = vxor.u32 %v718, 2147483648
        %v723 = vmul.f32 %v722, 1.442695
        %v724 = vpow.pop %v723
        %v725 = vadd.f32 %v724, 1.0
        %v726 = vrcp.pop %v725
        %v727 = vmul.f32 %v725, %v726
        %v728 = vsub.f32 1.0, %v727
        %v729 = vmul.f32 %v726, %v728
        %v730 = vadd.f32 %v726, %v729
        %vm731 = vweird.f32 %v725
        %vm732 = vweird.f32 %v726
        %vm733 = vmor %vm731, %vm732
        %v734 = vsel %vm733, %v726, %v730
        %v735 = vand.u32 2147483647, %v725
        %vm736 = vcmp.eq.f32.partialorder %v735, 8.507059e+37
        %v737 = vand.u32 %v725, 2147483648
        %v738 = vor.u32 1.1754944e-38, %v737
        %v739 = vsel %vm736, %v738, %v734
        %v740 = vmul.f32 1.0, %v739
        %v741 = vxor.u32 %v719, 2147483648
        %v742 = vmul.f32 %v741, 1.442695
        %v743 = vpow.pop %v742
        %v744 = vadd.f32 %v743, 1.0
        %v745 = vrcp.pop %v744
        %v746 = vmul.f32 %v744, %v745
        %v747 = vsub.f32 1.0, %v746
        %v748 = vmul.f32 %v745, %v747
        %v749 = vadd.f32 %v745, %v748
        %vm750 = vweird.f32 %v744
        %vm751 = vweird.f32 %v745
        %vm752 = vmor %vm750, %vm751
        %v753 = vsel %vm752, %v745, %v749
        %v754 = vand.u32 2147483647, %v744
        %vm755 = vcmp.eq.f32.partialorder %v754, 8.507059e+37
        %v756 = vand.u32 %v744, 2147483648
        %v757 = vor.u32 1.1754944e-38, %v756
        %v758 = vsel %vm755, %v757, %v753
        %v759 = vmul.f32 1.0, %v758
        %v760 = vtanh.pop %v720
        %v761 = vxor.u32 %v721, 2147483648
        %v762 = vmul.f32 %v761, 1.442695
        %v763 = vpow.pop %v762
        %v764 = vadd.f32 %v763, 1.0
        %v765 = vrcp.pop %v764
        %v766 = vmul.f32 %v764, %v765
        %v767 = vsub.f32 1.0, %v766
        %v768 = vmul.f32 %v765, %v767
        %v769 = vadd.f32 %v765, %v768
        %vm770 = vweird.f32 %v764
        %vm771 = vweird.f32 %v765
        %vm772 = vmor %vm770, %vm771
        %v773 = vsel %vm772, %v765, %v769
        %v774 = vand.u32 2147483647, %v764
        %vm775 = vcmp.eq.f32.partialorder %v774, 8.507059e+37
        %v776 = vand.u32 %v764, 2147483648
        %v777 = vor.u32 1.1754944e-38, %v776
        %v778 = vsel %vm775, %v777, %v773
        %v779 = vmul.f32 1.0, %v778
        %v780 = vmul.f32 %v759, %v621
        %v781 = vmul.f32 %v740, %v760
        %v782 = vadd.f32 %v780, %v781
        %v783 = vtanh.pop %v782
        %v784 = vmul.f32 %v779, %v783
        %s785 = sadd.s32 %s309, 2
        %v786 = vstv %s785
        %vm787 = vcmp.eq.s32.totalorder %v308, %v786
        %v788 = vsel %vm787, 1, 0
        %789 = vset.pattern.permute.xlu0 0
        %790 = vperm.xlu0 %789, %v788
        %v791 = vpop.permute.xlu0 %790
        %vm792 = vcmp.eq.s32.totalorder %v791, 1
        %v793 = vsel %vm792, %v784, %v632
        %s794 = scalar_lea.vmem %s203, 96 [#allocation4]
        %v795 = vld [vmem:[%s794] sm:$0xff]
        %v796 = vld [vmem:[%s794 + $0x8] sm:$0xff]
        %v797 = vld [vmem:[%s794 + $0x10] sm:$0xff]
        %v798 = vld [vmem:[%s794 + $0x18] sm:$0xff]
        %799 = vmatpush.msra.mxu0 %v303
        %800 = vmatpush.msra.mxu0 %v299
        %801 = vmatpush.msra.mxu0 %v295
        %802 = vmatpush.msra.mxu0 %v291
        %803 = vmatpush.msra.mxu0 %v287
        %804 = vmatpush.msra.mxu0 %v283
        %805 = vmatpush.msra.mxu0 %v279
        %806 = vmatpush.msra.mxu0 %v275
        %807 = vmatpush.msra.mxu0 %v271
        %808 = vmatpush.msra.mxu0 %v267
        %809 = vmatpush.msra.mxu0 %v263
        %810 = vmatpush.msra.mxu0 %v259
        %811 = vmatpush.msra.mxu0 %v255
        %812 = vmatpush.msra.mxu0 %v251
        %813 = vmatpush.msra.mxu0 %v247
        %814 = vmatpush.msra.mxu0 %v243
        %815 = vmatmul.f32.gmra.mxu0 %v784
        %v816 = vpop.f32.mrf.mxu0
        %v817 = vadd.f32 0.0, %v816
        %818 = vdwg.mxu0
        %819 = vmatpush.msra.mxu0 %v304
        %820 = vmatpush.msra.mxu0 %v300
        %821 = vmatpush.msra.mxu0 %v296
        %822 = vmatpush.msra.mxu0 %v292
        %823 = vmatpush.msra.mxu0 %v288
        %824 = vmatpush.msra.mxu0 %v284
        %825 = vmatpush.msra.mxu0 %v280
        %826 = vmatpush.msra.mxu0 %v276
        %827 = vmatpush.msra.mxu0 %v272
        %828 = vmatpush.msra.mxu0 %v268
        %829 = vmatpush.msra.mxu0 %v264
        %830 = vmatpush.msra.mxu0 %v260
        %831 = vmatpush.msra.mxu0 %v256
        %832 = vmatpush.msra.mxu0 %v252
        %833 = vmatpush.msra.mxu0 %v248
        %834 = vmatpush.msra.mxu0 %v244
        %835 = vmatmul.f32.gmra.mxu0 %v784
        %v836 = vpop.f32.mrf.mxu0
        %v837 = vadd.f32 0.0, %v836
        %838 = vdwg.mxu0
        %839 = vmatpush.msra.mxu0 %v305
        %840 = vmatpush.msra.mxu0 %v301
        %841 = vmatpush.msra.mxu0 %v297
        %842 = vmatpush.msra.mxu0 %v293
        %843 = vmatpush.msra.mxu0 %v289
        %844 = vmatpush.msra.mxu0 %v285
        %845 = vmatpush.msra.mxu0 %v281
        %846 = vmatpush.msra.mxu0 %v277
        %847 = vmatpush.msra.mxu0 %v273
        %848 = vmatpush.msra.mxu0 %v269
        %849 = vmatpush.msra.mxu0 %v265
        %850 = vmatpush.msra.mxu0 %v261
        %851 = vmatpush.msra.mxu0 %v257
        %852 = vmatpush.msra.mxu0 %v253
        %853 = vmatpush.msra.mxu0 %v249
        %854 = vmatpush.msra.mxu0 %v245
        %855 = vmatmul.f32.gmra.mxu0 %v784
        %v856 = vpop.f32.mrf.mxu0
        %v857 = vadd.f32 0.0, %v856
        %858 = vdwg.mxu0
        %859 = vmatpush.msra.mxu0 %v306
        %860 = vmatpush.msra.mxu0 %v302
        %861 = vmatpush.msra.mxu0 %v298
        %862 = vmatpush.msra.mxu0 %v294
        %863 = vmatpush.msra.mxu0 %v290
        %864 = vmatpush.msra.mxu0 %v286
        %865 = vmatpush.msra.mxu0 %v282
        %866 = vmatpush.msra.mxu0 %v278
        %867 = vmatpush.msra.mxu0 %v274
        %868 = vmatpush.msra.mxu0 %v270
        %869 = vmatpush.msra.mxu0 %v266
        %870 = vmatpush.msra.mxu0 %v262
        %871 = vmatpush.msra.mxu0 %v258
        %872 = vmatpush.msra.mxu0 %v254
        %873 = vmatpush.msra.mxu0 %v250
        %874 = vmatpush.msra.mxu0 %v246
        %875 = vmatmul.f32.gmra.mxu0 %v784
        %v876 = vpop.f32.mrf.mxu0
        %v877 = vadd.f32 0.0, %v876
        %878 = vdwg.mxu0
        %v879 = vadd.f32 %v795, %v817
        %v880 = vadd.f32 %v796, %v837
        %v881 = vadd.f32 %v797, %v857
        %v882 = vadd.f32 %v798, %v877
        %v883 = vxor.u32 %v879, 2147483648
        %v884 = vmul.f32 %v883, 1.442695
        %v885 = vpow.pop %v884
        %v886 = vadd.f32 %v885, 1.0
        %v887 = vrcp.pop %v886
        %v888 = vmul.f32 %v886, %v887
        %v889 = vsub.f32 1.0, %v888
        %v890 = vmul.f32 %v887, %v889
        %v891 = vadd.f32 %v887, %v890
        %vm892 = vweird.f32 %v886
        %vm893 = vweird.f32 %v887
        %vm894 = vmor %vm892, %vm893
        %v895 = vsel %vm894, %v887, %v891
        %v896 = vand.u32 2147483647, %v886
        %vm897 = vcmp.eq.f32.partialorder %v896, 8.507059e+37
        %v898 = vand.u32 %v886, 2147483648
        %v899 = vor.u32 1.1754944e-38, %v898
        %v900 = vsel %vm897, %v899, %v895
        %v901 = vmul.f32 1.0, %v900
        %v902 = vxor.u32 %v880, 2147483648
        %v903 = vmul.f32 %v902, 1.442695
        %v904 = vpow.pop %v903
        %v905 = vadd.f32 %v904, 1.0
        %v906 = vrcp.pop %v905
        %v907 = vmul.f32 %v905, %v906
        %v908 = vsub.f32 1.0, %v907
        %v909 = vmul.f32 %v906, %v908
        %v910 = vadd.f32 %v906, %v909
        %vm911 = vweird.f32 %v905
        %vm912 = vweird.f32 %v906
        %vm913 = vmor %vm911, %vm912
        %v914 = vsel %vm913, %v906, %v910
        %v915 = vand.u32 2147483647, %v905
        %vm916 = vcmp.eq.f32.partialorder %v915, 8.507059e+37
        %v917 = vand.u32 %v905, 2147483648
        %v918 = vor.u32 1.1754944e-38, %v917
        %v919 = vsel %vm916, %v918, %v914
        %v920 = vmul.f32 1.0, %v919
        %v921 = vtanh.pop %v881
        %v922 = vxor.u32 %v882, 2147483648
        %v923 = vmul.f32 %v922, 1.442695
        %v924 = vpow.pop %v923
        %v925 = vadd.f32 %v924, 1.0
        %v926 = vrcp.pop %v925
        %v927 = vmul.f32 %v925, %v926
        %v928 = vsub.f32 1.0, %v927
        %v929 = vmul.f32 %v926, %v928
        %v930 = vadd.f32 %v926, %v929
        %vm931 = vweird.f32 %v925
        %vm932 = vweird.f32 %v926
        %vm933 = vmor %vm931, %vm932
        %v934 = vsel %vm933, %v926, %v930
        %v935 = vand.u32 2147483647, %v925
        %vm936 = vcmp.eq.f32.partialorder %v935, 8.507059e+37
        %v937 = vand.u32 %v925, 2147483648
        %v938 = vor.u32 1.1754944e-38, %v937
        %v939 = vsel %vm936, %v938, %v934
        %v940 = vmul.f32 1.0, %v939
        %v941 = vmul.f32 %v920, %v782
        %v942 = vmul.f32 %v901, %v921
        %v943 = vadd.f32 %v941, %v942
        %v944 = vtanh.pop %v943
        %v945 = vmul.f32 %v940, %v944
        %s946 = sadd.s32 %s309, 3
        %v947 = vstv %s946
        %vm948 = vcmp.eq.s32.totalorder %v308, %v947
        %v949 = vsel %vm948, 1, 0
        %950 = vset.pattern.permute.xlu0 0
        %951 = vperm.xlu0 %950, %v949
        %v952 = vpop.permute.xlu0 %951
        %vm953 = vcmp.eq.s32.totalorder %v952, 1
        %v954 = vsel %vm953, %v945, %v793
        %955 = vst [vmem:[#allocation2] sm:$0xff] %v945
        %956 = vst [vmem:[#allocation3] sm:$0xff] %v943
        %957 = vst [vmem:[#allocation9] sm:$0xff] %v954
        // Predicated region
        $region45: #{tpu_custom_call.1} parent=31 // pred_check
          %p958 = pneg %p124
        $region46: #{tpu_custom_call.1} parent=31 // pred_check_branch
          %960 = sbr.rel (%p958) target = $region48
        $region47: #{tpu_custom_call.1} parent=31 // pred_region
          %962 = vsyncadd [#allocation6], 0
          %s963 = smul.addr %s23, 8
          %s964 = scalar_lea.hbm %s3, %s963
          %s966 = sshll.u32 [#allocation9], 4
          %s967 = int_to_ptr.vmem [resolvable:$true] %s966
          %s968 = sshll.u32 %s964, 4
          %s969 = int_to_ptr.hbm [resolvable:$true] %s968
          %971 = dma.vmem_to_hbm [thread:$0]  %s967, 128, %s969, [#allocation6]
        $region48: #{tpu_custom_call.1} parent=31 // pred_fallthru
          _
        // Predicated region
        $region49: #{tpu_custom_call.1} parent=31 // pred_check
          %p972 = pneg %p124
        $region50: #{tpu_custom_call.1} parent=31 // pred_check_branch
          %974 = sbr.rel (%p972) target = $region52
        $region51: #{tpu_custom_call.1} parent=31 // pred_region
          %976 = dma.done [#allocation6], 128
        $region52: #{tpu_custom_call.1} parent=31 // pred_fallthru
          _
      $region32: #{tpu_custom_call.1} parent=5 // pred_fallthru
        _
      %p977 = scmp.le.s32.totalorder 2, %s14
      // Predicated region
      $region53: #{tpu_custom_call.1} parent=5 // pred_check
        %p978 = pneg %p977
      $region54: #{tpu_custom_call.1} parent=5 // pred_check_branch
        %980 = sbr.rel (%p978) target = $region56
      $region55: #{tpu_custom_call.1} parent=5 // pred_region
        %s981 = ssub.s32 %s14, 2
      $region56: #{tpu_custom_call.1} parent=5 // pred_fallthru
        _
    $region6: #{tpu_custom_call.1} parent=1 // loop_footer
      %s18 = sadd.s32 1, %s14
    $region7: #{tpu_custom_call.1} parent=1 // loop_footer_branch
      %13 = sbr.rel target = $region3
    $region8: #{tpu_custom_call.1} parent=1 // loop_exit
      _
    %982 = vsyncpa [#allocation5], 1
    %s983 = scalar_lea.sflag [#allocation5], 1
    %984 = vsyncpa %s983, 1
    %985 = vsyncpa [#allocation8], 1
    %986 = vsyncpa [#allocation6], 1
    %s987 = scalar_lea.sflag [#allocation6], 1
    %988 = vsyncpa %s987, 1

</llo_original>
